<compile_context>
chip_gen: v6e
topology: v6e:2x2x1
jax: 0.10.0
libtpu: 0.0.40
codegen_flags: <defaults>
</compile_context>

<pallas_src>
import functools

import jax
import jax.numpy as jnp
from jax.experimental import pallas as pl
from jax.experimental.pallas import tpu as pltpu


_MiB = 1024 * 1024
_TWO_PASS_BLOCK_BYTES = 4 * _MiB   # target x-block size for the tiled path


def _round_up(n, m):
    return ((n + m - 1) // m) * m


def _vmem_capacity_bytes():
    """Physical VMEM of the current generation (trace-time query)."""
    try:
        return int(pltpu.get_tpu_info().vmem_capacity_bytes)
    except Exception:
        return 64 * _MiB            # conservative (v7x-sized) fallback


def _device_kind():
    try:
        return jax.devices()[0].device_kind.lower()
    except Exception:
        return ""


# ---------------------------------------------------------------------------
# Kernel bodies
# ---------------------------------------------------------------------------

def _mlp_gate(mx, av, w1_ref, b1_ref, w2_ref, b2_ref):
    """Shared-MLP channel gate.  mx/av: (C, 1) f32 column vectors."""
    pooled = jnp.concatenate([mx, av], axis=1)                           # (C, 2)
    w1 = w1_ref[...].astype(jnp.float32)                                 # (Cr, C)
    b1 = b1_ref[...].astype(jnp.float32)                                 # (Cr, 1)
    w2 = w2_ref[...].astype(jnp.float32)                                 # (C, Cr)
    b2 = b2_ref[...].astype(jnp.float32)                                 # (C, 1)
    h = jnp.dot(w1, pooled, preferred_element_type=jnp.float32) + b1     # (Cr, 2)
    h = jnp.maximum(h, 0.0)                                              # ReLU
    y = jnp.dot(w2, h, preferred_element_type=jnp.float32) + b2          # (C, 2)
    # Each column carries its own +b2, matching MLP(max) + MLP(avg).
    return jax.nn.sigmoid(jnp.sum(y, axis=1, keepdims=True))             # (C, 1)


def _cam_fused_kernel(x_ref, w1_ref, b1_ref, w2_ref, b2_ref, o_ref, *,
                      hw, compute_dtype):
    """Single-pass CAM: block = (1, C, HW); C on sublanes, HW on lanes."""
    xf = x_ref[0].astype(jnp.float32)                                    # (C, HW)
    mx = jnp.max(xf, axis=1, keepdims=True)                              # (C, 1)
    av = jnp.sum(xf, axis=1, keepdims=True) * (1.0 / hw)                 # (C, 1)
    gate = _mlp_gate(mx, av, w1_ref, b1_ref, w2_ref, b2_ref)             # (C, 1) f32
    g = gate.astype(compute_dtype)
    # Re-read x_ref (fresh vlds) for the gated multiply; multiply in the
    # compute dtype (bf16 on v6e/v7x for bf16 inputs, f32 otherwise).
    o_ref[0] = (x_ref[0].astype(compute_dtype) * g).astype(o_ref.dtype)


def _cam_reduce_kernel(x_ref, pooled_ref, max_acc, sum_acc, *, hw, tile):
    """Two-pass path, pass 1: per-channel max/mean over HW tiles.

    Emits pooled stats (1, C, 2) = [max, mean]; the gate MLP runs in XLA.
    Partial-tile masking only runs on the last (ragged) tile.
    """
    t = pl.program_id(1)
    nt = pl.num_programs(1)

    @pl.when(t == 0)
    def _():
        max_acc[...] = jnp.full(max_acc.shape, -jnp.inf, max_acc.dtype)
        sum_acc[...] = jnp.zeros(sum_acc.shape, sum_acc.dtype)

    rem = hw % tile
    if rem != 0:
        @pl.when(t != nt - 1)
        def _():
            xf = x_ref[0].astype(jnp.float32)                            # (C, tile)
            max_acc[...] = jnp.maximum(max_acc[...],
                                       jnp.max(xf, axis=1, keepdims=True))
            sum_acc[...] = sum_acc[...] + jnp.sum(xf, axis=1, keepdims=True)

        @pl.when(t == nt - 1)
        def _():
            xf = x_ref[0].astype(jnp.float32)
            lane = jax.lax.broadcasted_iota(jnp.int32, xf.shape, 1)
            valid = lane < rem
            max_acc[...] = jnp.maximum(
                max_acc[...],
                jnp.max(jnp.where(valid, xf, -jnp.inf), axis=1, keepdims=True))
            sum_acc[...] = sum_acc[...] + jnp.sum(
                jnp.where(valid, xf, 0.0), axis=1, keepdims=True)
    else:
        xf = x_ref[0].astype(jnp.float32)
        max_acc[...] = jnp.maximum(max_acc[...],
                                   jnp.max(xf, axis=1, keepdims=True))
        sum_acc[...] = sum_acc[...] + jnp.sum(xf, axis=1, keepdims=True)

    @pl.when(t == nt - 1)
    def _():
        pooled_ref[0] = jnp.concatenate(
            [max_acc[...], sum_acc[...] * (1.0 / hw)], axis=1)           # (C, 2)


def _cam_apply_kernel(x_ref, gate_ref, o_ref, *, compute_dtype):
    """Two-pass path, pass 2: lane-dense elementwise gate * x."""
    g = gate_ref[0].astype(compute_dtype)                                # (C, 1)
    o_ref[0] = (x_ref[0].astype(compute_dtype) * g).astype(o_ref.dtype)


# ---------------------------------------------------------------------------
# Wrapper
# ---------------------------------------------------------------------------

@functools.partial(jax.jit, static_argnames=("force_two_pass", "hw_tile"))
def cam_forward(x_nchw, w1, b1, w2, b2, *, force_two_pass=False, hw_tile=None):
    """CAM forward.  x_nchw: (B, C, H, W).

    Weights use PyTorch nn.Linear layout:
      w1: (C//r, C), b1: (C//r,), w2: (C, C//r), b2: (C,).
    """
    B, C, H, W = x_nchw.shape
    HW = H * W
    Cr = w1.shape[0]
    itemsize = x_nchw.dtype.itemsize

    # --- generation-aware budgets ---
    kind = _device_kind()
    vmem_cap = _vmem_capacity_bytes()                  # 128 MiB v5e/v6e, 64 MiB v7x
    vmem_cap_limit = max(32 * _MiB, vmem_cap - 16 * _MiB)   # ~112 / ~48 MiB
    single_pass_budget = (vmem_cap * 3) // 4                 # ~96 / ~48 MiB

    old_gen = any(g in kind for g in ("v2", "v3", "v4", "v5"))
    if x_nchw.dtype == jnp.bfloat16 and not old_gen:
        compute_dtype = jnp.bfloat16       # native bf16 VALU on v6e/v7x
    else:
        compute_dtype = jnp.float32

    x3 = x_nchw.reshape(B, C, HW)          # free reshape, no transpose
    b1_2d = b1.reshape(Cr, 1)
    b2_2d = b2.reshape(C, 1)

    slab_bytes = C * HW * itemsize
    weight_bytes = 2 * 4 * (Cr * C + Cr + C * Cr + C)        # double-buffered f32
    fits_double = 4 * slab_bytes + weight_bytes <= single_pass_budget
    fits_single = 2 * slab_bytes + weight_bytes <= single_pass_budget
    # A 1-step grid cannot pipeline; single-buffer the slab only when that is
    # what keeps us on the fused 1-read/1-write path.
    use_single_buffer = (B == 1) and fits_single and not fits_double
    # v7x has 2 TensorCores; a single-step 'parallel' grid idles one of them,
    # so large B==1 slabs prefer the (B, nT)-parallel two-pass path there.
    prefer_two_pass = ("v7" in kind) and (B == 1) and (slab_bytes >= 8 * _MiB)

    if (not force_two_pass and (fits_double or use_single_buffer)
            and not prefer_two_pass):
        vmem_need = ((2 if use_single_buffer else 4) * slab_bytes
                     + weight_bytes + 2 * _MiB)
        vmem_limit = int(min(max(vmem_need, 16 * _MiB), vmem_cap_limit))

        if use_single_buffer:
            x_spec = pl.BlockSpec((1, C, HW), lambda b: (b, 0, 0),
                                  pipeline_mode=pl.Buffered(1))
            o_spec = pl.BlockSpec((1, C, HW), lambda b: (b, 0, 0),
                                  pipeline_mode=pl.Buffered(1))
        else:
            x_spec = pl.BlockSpec((1, C, HW), lambda b: (b, 0, 0))
            o_spec = pl.BlockSpec((1, C, HW), lambda b: (b, 0, 0))

        cost = pl.CostEstimate(
            flops=int(3 * B * C * HW + 8 * B * C * Cr),
            transcendentals=int(B * C),
            bytes_accessed=int(2 * B * C * HW * itemsize + weight_bytes // 2))

        out3 = pl.pallas_call(
            functools.partial(_cam_fused_kernel, hw=HW,
                              compute_dtype=compute_dtype),
            out_shape=jax.ShapeDtypeStruct((B, C, HW), x_nchw.dtype),
            grid_spec=pltpu.PrefetchScalarGridSpec(
                num_scalar_prefetch=0,
                grid=(B,),
                in_specs=[
                    x_spec,                                        # x slab
                    pl.BlockSpec((Cr, C), lambda b: (0, 0)),       # w1
                    pl.BlockSpec((Cr, 1), lambda b: (0, 0)),       # b1
                    pl.BlockSpec((C, Cr), lambda b: (0, 0)),       # w2
                    pl.BlockSpec((C, 1), lambda b: (0, 0)),        # b2
                ],
                out_specs=o_spec,
            ),
            compiler_params=pltpu.CompilerParams(
                dimension_semantics=("parallel",),
                vmem_limit_bytes=vmem_limit),
            cost_estimate=cost,
        )(x3, w1, b1_2d, w2, b2_2d)
        return out3.reshape(B, C, H, W)

    # ---- Two-pass path: pooled stats -> XLA gate -> apply, tiled over HW ----
    if hw_tile is None:
        max_block = max(128 * C * itemsize, (vmem_cap_limit - 8 * _MiB) // 4)
        target = min(_TWO_PASS_BLOCK_BYTES, max_block)
        T = max(128, (target // (C * itemsize)) // 128 * 128)
    else:
        T = hw_tile
    T = min(T, _round_up(HW, 128))
    nT = pl.cdiv(HW, T)
    block_bytes = C * T * itemsize
    vmem_limit = int(min(max(4 * block_bytes + 4 * _MiB, 16 * _MiB),
                         vmem_cap_limit))

    reduce_cost = pl.CostEstimate(
        flops=int(2 * B * C * HW), transcendentals=0,
        bytes_accessed=int(B * C * HW * itemsize + B * C * 2 * 4))

    pooled = pl.pallas_call(
        functools.partial(_cam_reduce_kernel, hw=HW, tile=T),
        out_shape=jax.ShapeDtypeStruct((B, C, 2), jnp.float32),
        grid_spec=pltpu.PrefetchScalarGridSpec(
            num_scalar_prefetch=0,
            grid=(B, nT),
            in_specs=[pl.BlockSpec((1, C, T), lambda b, t: (b, 0, t))],
            out_specs=pl.BlockSpec((1, C, 2), lambda b, t: (b, 0, 0)),
            scratch_shapes=[pltpu.VMEM((C, 1), jnp.float32),   # running max
                            pltpu.VMEM((C, 1), jnp.float32)],  # running sum
        ),
        compiler_params=pltpu.CompilerParams(
            dimension_semantics=("parallel", "arbitrary"),
            vmem_limit_bytes=vmem_limit),
        cost_estimate=reduce_cost,
    )(x3)

    # Tiny shared-MLP gate over (B, C) pooled stats: plain XLA (one batched
    # matmul), no weight residency inside the HW-tiled loops.
    mx = pooled[:, :, 0]
    av = pooled[:, :, 1]

    def mlp(v):
        h = jnp.maximum(v @ w1.T.astype(jnp.float32) + b1.astype(jnp.float32),
                        0.0)
        return h @ w2.T.astype(jnp.float32) + b2.astype(jnp.float32)

    gate = jax.nn.sigmoid(mlp(mx) + mlp(av))                  # (B, C) f32
    gate3 = gate.reshape(B, C, 1)

    apply_cost = pl.CostEstimate(
        flops=int(B * C * HW), transcendentals=0,
        bytes_accessed=int(2 * B * C * HW * itemsize + B * C * 4))

    out3 = pl.pallas_call(
        functools.partial(_cam_apply_kernel, compute_dtype=compute_dtype),
        out_shape=jax.ShapeDtypeStruct((B, C, HW), x_nchw.dtype),
        grid_spec=pltpu.PrefetchScalarGridSpec(
            num_scalar_prefetch=0,
            grid=(B, nT),
            in_specs=[
                pl.BlockSpec((1, C, T), lambda b, t: (b, 0, t)),
                pl.BlockSpec((1, C, 1), lambda b, t: (b, 0, 0)),
            ],
            out_specs=pl.BlockSpec((1, C, T), lambda b, t: (b, 0, t)),
        ),
        compiler_params=pltpu.CompilerParams(
            dimension_semantics=("parallel", "parallel"),
            vmem_limit_bytes=vmem_limit),
        cost_estimate=apply_cost,
    )(x3, gate3)
    return out3.reshape(B, C, H, W)


# ---------------------------------------------------------------------------
# Plain-JAX reference (mirrors the PyTorch module; PyTorch Linear layout)
# ---------------------------------------------------------------------------

def cam_reference(x, w1, b1, w2, b2):
    mx = jnp.max(x, axis=(2, 3))     # (B, C)
    av = jnp.mean(x, axis=(2, 3))    # (B, C)

    def mlp(v):
        h = jnp.maximum(v @ w1.T + b1, 0.0)
        return h @ w2.T + b2

    gate = jax.nn.sigmoid(mlp(mx) + mlp(av))            # (B, C)
    return gate[:, :, None, None] * x


if __name__ == "__main__":
    B, C, H, W = 2, 8, 16, 16
    r = 2
    Cr = C // r

    key = jax.random.PRNGKey(0)
    kx, kw1, kb1, kw2, kb2 = jax.random.split(key, 5)

    x = jax.random.normal(kx, (B, C, H, W), dtype=jnp.float32)

    # PyTorch nn.Linear-style init: uniform(-1/sqrt(fan_in), 1/sqrt(fan_in)).
    bound1 = 1.0 / (C ** 0.5)
    bound2 = 1.0 / (Cr ** 0.5)
    w1 = jax.random.uniform(kw1, (Cr, C), jnp.float32, -bound1, bound1)   # Linear(C, Cr)
    b1 = jax.random.uniform(kb1, (Cr,), jnp.float32, -bound1, bound1)
    w2 = jax.random.uniform(kw2, (C, Cr), jnp.float32, -bound2, bound2)   # Linear(Cr, C)
    b2 = jax.random.uniform(kb2, (C,), jnp.float32, -bound2, bound2)

    ref = cam_reference(x, w1, b1, w2, b2)

    # 1) Single-pass fused path (auto-selected).
    out = jax.block_until_ready(cam_forward(x, w1, b1, w2, b2))
    assert out.shape == (B, C, H, W)
    assert jnp.allclose(out, ref, atol=1e-5, rtol=1e-5), "single-pass mismatch"

    # 2) Tiled reduce -> XLA gate -> apply path (what VMEM-constrained shapes use).
    out2 = jax.block_until_ready(
        cam_forward(x, w1, b1, w2, b2, force_two_pass=True, hw_tile=128))
    assert jnp.allclose(out2, ref, atol=1e-5, rtol=1e-5), "two-pass mismatch"

    # 3) Two-pass with a ragged last tile (exercises the pl.when-gated mask).
    xr = jax.random.normal(kx, (B, C, 16, 12), dtype=jnp.float32)
    ref_r = cam_reference(xr, w1, b1, w2, b2)
    out_r = jax.block_until_ready(
        cam_forward(xr, w1, b1, w2, b2, force_two_pass=True, hw_tile=128))
    assert jnp.allclose(out_r, ref_r, atol=1e-5, rtol=1e-5), "ragged two-pass mismatch"

    # 4) bf16 input: gate stays f32, gated multiply runs natively on v6e/v7x.
    x_bf = x.astype(jnp.bfloat16)
    ref_bf = cam_reference(x_bf.astype(jnp.float32), w1, b1, w2, b2)
    out_bf = jax.block_until_ready(cam_forward(x_bf, w1, b1, w2, b2))
    assert out_bf.dtype == jnp.bfloat16
    assert jnp.allclose(out_bf.astype(jnp.float32), ref_bf,
                        atol=2e-2, rtol=2e-2), "bf16 mismatch"

    # 5) B == 1 path.
    x1 = x[:1]
    ref1 = cam_reference(x1, w1, b1, w2, b2)
    out1 = jax.block_until_ready(cam_forward(x1, w1, b1, w2, b2))
    assert jnp.allclose(out1, ref1, atol=1e-5, rtol=1e-5), "B=1 mismatch"

    print("KERNEL_OK")
</pallas_src>

<mosaic_0001>
module attributes {stable_mosaic.version = 11 : i64} {
  func.func @_cam_fused_kernel(%arg0: i32, %arg1: memref<1x8x256xf32, #tpu.memory_space<vmem>>, %arg2: memref<4x8xf32, #tpu.memory_space<vmem>>, %arg3: memref<4x1xf32, #tpu.memory_space<vmem>>, %arg4: memref<8x4xf32, #tpu.memory_space<vmem>>, %arg5: memref<8x1xf32, #tpu.memory_space<vmem>>, %arg6: memref<1x8x256xf32, #tpu.memory_space<vmem>>) attributes {dimension_semantics = [#tpu.dimension_semantics<parallel>], iteration_bounds = array<i64: 2>, scalar_prefetch = 0 : i64, scratch_operands = 0 : i64, tpu.core_type = #tpu.core_type<tc>, window_params = [{transform_indices = @transform_0, window_bounds = array<i64: 1, 8, 256>}, {pipeline_mode = #tpu.pipeline_mode<synchronous>, transform_indices = @transform_1, window_bounds = array<i64: 4, 8>}, {pipeline_mode = #tpu.pipeline_mode<synchronous>, transform_indices = @transform_2, window_bounds = array<i64: 4, 1>}, {pipeline_mode = #tpu.pipeline_mode<synchronous>, transform_indices = @transform_3, window_bounds = array<i64: 8, 4>}, {pipeline_mode = #tpu.pipeline_mode<synchronous>, transform_indices = @transform_4, window_bounds = array<i64: 8, 1>}, {transform_indices = @transform_5, window_bounds = array<i64: 1, 8, 256>}]} {
    %c0 = arith.constant 0 : index
    %c0_0 = arith.constant 0 : index
    %c0_1 = arith.constant 0 : index
    %0 = vector.load %arg1[%c0, %c0_0, %c0_1] : memref<1x8x256xf32, #tpu.memory_space<vmem>>, vector<1x8x256xf32>
    %1 = vector.shape_cast %0 : vector<1x8x256xf32> to vector<8x256xf32>
    %cst = arith.constant dense<0xFF800000> : vector<8xf32>
    %2 = vector.multi_reduction <maximumf>, %1, %cst [1] : vector<8x256xf32> to vector<8xf32>
    %3 = vector.shape_cast %2 : vector<8xf32> to vector<8x1xf32>
    %cst_2 = arith.constant dense<0.000000e+00> : vector<8xf32>
    %4 = vector.multi_reduction <add>, %1, %cst_2 [1] : vector<8x256xf32> to vector<8xf32>
    %5 = vector.shape_cast %4 : vector<8xf32> to vector<8x1xf32>
    %cst_3 = arith.constant 3.906250e-03 : f32
    %6 = vector.broadcast %cst_3 : f32 to vector<8x1xf32>
    %7 = arith.mulf %5, %6 : vector<8x1xf32>
    %8 = tpu.concatenate %3, %7 in 1 : vector<8x1xf32>, vector<8x1xf32> -> vector<8x2xf32>
    %c0_4 = arith.constant 0 : index
    %c0_5 = arith.constant 0 : index
    %9 = vector.load %arg2[%c0_4, %c0_5] : memref<4x8xf32, #tpu.memory_space<vmem>>, vector<4x8xf32>
    %c0_6 = arith.constant 0 : index
    %c0_7 = arith.constant 0 : index
    %10 = vector.load %arg3[%c0_6, %c0_7] : memref<4x1xf32, #tpu.memory_space<vmem>>, vector<4x1xf32>
    %c0_8 = arith.constant 0 : index
    %c0_9 = arith.constant 0 : index
    %11 = vector.load %arg4[%c0_8, %c0_9] : memref<8x4xf32, #tpu.memory_space<vmem>>, vector<8x4xf32>
    %c0_10 = arith.constant 0 : index
    %c0_11 = arith.constant 0 : index
    %12 = vector.load %arg5[%c0_10, %c0_11] : memref<8x1xf32, #tpu.memory_space<vmem>>, vector<8x1xf32>
    %cst_12 = arith.constant dense<0.000000e+00> : vector<4x2xf32>
    %13 = tpu.matmul %9, %8, %cst_12 {dimension_numbers = #tpu.dot_dimension_numbers<[1], [0], [0], [1], [0, 0, 1, 1], [], []>} : vector<4x8xf32>, vector<8x2xf32>, vector<4x2xf32> -> vector<4x2xf32>
    %14 = vector.broadcast %10 : vector<4x1xf32> to vector<4x2xf32>
    %15 = arith.addf %13, %14 : vector<4x2xf32>
    %cst_13 = arith.constant 0.000000e+00 : f32
    %16 = vector.broadcast %cst_13 : f32 to vector<4x2xf32>
    %17 = arith.maximumf %15, %16 : vector<4x2xf32>
    %cst_14 = arith.constant dense<0.000000e+00> : vector<8x2xf32>
    %18 = tpu.matmul %11, %17, %cst_14 {dimension_numbers = #tpu.dot_dimension_numbers<[1], [0], [0], [1], [0, 0, 1, 1], [], []>} : vector<8x4xf32>, vector<4x2xf32>, vector<8x2xf32> -> vector<8x2xf32>
    %19 = vector.broadcast %12 : vector<8x1xf32> to vector<8x2xf32>
    %20 = arith.addf %18, %19 : vector<8x2xf32>
    %cst_15 = arith.constant dense<0.000000e+00> : vector<8xf32>
    %21 = vector.multi_reduction <add>, %20, %cst_15 [1] : vector<8x2xf32> to vector<8xf32>
    %22 = vector.shape_cast %21 : vector<8xf32> to vector<8x1xf32>
    %23 = arith.negf %22 : vector<8x1xf32>
    %24 = math.exp %23 : vector<8x1xf32>
    %cst_16 = arith.constant 1.000000e+00 : f32
    %25 = vector.broadcast %cst_16 : f32 to vector<8x1xf32>
    %26 = arith.addf %25, %24 : vector<8x1xf32>
    %27 = arith.divf %25, %26 : vector<8x1xf32>
    %c0_17 = arith.constant 0 : index
    %c0_18 = arith.constant 0 : index
    %c0_19 = arith.constant 0 : index
    %28 = vector.load %arg1[%c0_17, %c0_18, %c0_19] : memref<1x8x256xf32, #tpu.memory_space<vmem>>, vector<1x8x256xf32>
    %29 = vector.shape_cast %28 : vector<1x8x256xf32> to vector<8x256xf32>
    %30 = vector.broadcast %27 : vector<8x1xf32> to vector<8x256xf32>
    %31 = arith.mulf %29, %30 : vector<8x256xf32>
    %c0_20 = arith.constant 0 : index
    %c0_21 = arith.constant 0 : index
    %c0_22 = arith.constant 0 : index
    %32 = vector.load %arg6[%c0_20, %c0_21, %c0_22] : memref<1x8x256xf32, #tpu.memory_space<vmem>>, vector<1x8x256xf32>
    %33 = vector.shape_cast %32 : vector<1x8x256xf32> to vector<8x256xf32>
    %34 = vector.shape_cast %31 : vector<8x256xf32> to vector<1x8x256xf32>
    tpu.vector_store %arg6[%c0_20, %c0_21, %c0_22], %34 {strides = array<i32>} : memref<1x8x256xf32, #tpu.memory_space<vmem>>, vector<1x8x256xf32>,
    return
  }
  func.func @transform_0(%arg0: i32) -> (i32, i32, i32) {
    %c0_i32 = arith.constant 0 : i32
    %c0_i32_0 = arith.constant 0 : i32
    %c0_i32_1 = arith.constant 0 : i32
    return %arg0, %c0_i32, %c0_i32_0 : i32, i32, i32
  }
  func.func @transform_1(%arg0: i32) -> (i32, i32) {
    %c0_i32 = arith.constant 0 : i32
    %c0_i32_0 = arith.constant 0 : i32
    %c0_i32_1 = arith.constant 0 : i32
    return %c0_i32, %c0_i32_0 : i32, i32
  }
  func.func @transform_2(%arg0: i32) -> (i32, i32) {
    %c0_i32 = arith.constant 0 : i32
    %c0_i32_0 = arith.constant 0 : i32
    %c0_i32_1 = arith.constant 0 : i32
    return %c0_i32, %c0_i32_0 : i32, i32
  }
  func.func @transform_3(%arg0: i32) -> (i32, i32) {
    %c0_i32 = arith.constant 0 : i32
    %c0_i32_0 = arith.constant 0 : i32
    %c0_i32_1 = arith.constant 0 : i32
    return %c0_i32, %c0_i32_0 : i32, i32
  }
  func.func @transform_4(%arg0: i32) -> (i32, i32) {
    %c0_i32 = arith.constant 0 : i32
    %c0_i32_0 = arith.constant 0 : i32
    %c0_i32_1 = arith.constant 0 : i32
    return %c0_i32, %c0_i32_0 : i32, i32
  }
  func.func @transform_5(%arg0: i32) -> (i32, i32, i32) {
    %c0_i32 = arith.constant 0 : i32
    %c0_i32_0 = arith.constant 0 : i32
    %c0_i32_1 = arith.constant 0 : i32
    return %arg0, %c0_i32, %c0_i32_0 : i32, i32, i32
  }
}

</mosaic_0001>

<llo_original>
// kernel: cam_forward.1
$region0: #{cam_forward.1}
  #allocation0 [shape = 'u32[]', space=smem, size = 0x4, offset = 0x4, fixed_abs, tag = 'smem constant byte address 0x4 - core index']
  #allocation1 [shape = 'u32[144,128]{1,0:T(1,128)}', space=vmem, size = 0x12000, scoped, tag = 'internal scratch']
  %s0 = inlined_call_operand.vmem [shape: f32[2,8,256], index: 0, kind: input, shape index: {}]
  %s1 = inlined_call_operand.vmem [shape: f32[4,8], index: 1, kind: input, shape index: {}]
  %s2 = inlined_call_operand.vmem [shape: f32[4,1], index: 2, kind: input, shape index: {}]
  %s3 = inlined_call_operand.vmem [shape: f32[8,4], index: 3, kind: input, shape index: {}]
  %s4 = inlined_call_operand.vmem [shape: f32[8,1], index: 4, kind: input, shape index: {}]
  %s5 = inlined_call_operand.vmem [shape: f32[2,8,256], index: 5, kind: output, shape index: {}]
  %s6 = sld [smem:[#allocation0]]
  $region53: #{cam_forward.1} parent=0
    _
  %s8 = ssub.s32 1, %s6
  %s9 = scalar_select 0, %s8, %s6
  loop: start=0, step=1, limit=4
  $region2: #{cam_forward.1} parent=0 // loop_pre_header
    _
  $region3: #{cam_forward.1} parent=0 // loop_header
    %s11 = sphi 0, %s15
    %p12 = scmp.ge.s32.totalorder %s11, 4
    %s21 = sphi 0, %s23
    %s24 = sphi 0, %s21
    %s25 = sphi 0, %s24
    %s41 = sphi 0, %s25
    %s45 = sphi 0, %s45
    %s47 = sphi 0, %s45
    %s48 = sphi 0, %s47
    %s62 = sphi 0, %s48
    %s66 = sphi 0, %s66
    %s68 = sphi 0, %s66
    %s69 = sphi 0, %s68
    %s83 = sphi 0, %s69
    %s87 = sphi 0, %s87
    %s89 = sphi 0, %s87
    %s90 = sphi 0, %s89
    %s104 = sphi 0, %s90
    %s108 = sphi 0, %s108
    %s110 = sphi 0, %s108
    %s111 = sphi 0, %s110
    %s125 = sphi 0, %s111
    %s131 = sphi 0, %s133
    %s134 = sphi 0, %s131
    %s135 = sphi 0, %s134
    %s151 = sphi 0, %s135
  $region4: #{cam_forward.1} parent=0 // loop_header_branch
    %14 = sbr.rel (%p12) target = $region8
  $region5: #{cam_forward.1} parent=0 // loop_body
    %s16 = ssub.s32 %s11, 1
    %s17 = ssub.s32 %s11, 2
    %s18 = sadd.s32 %s11, 1
    %s19 = ssub.s32 %s11, %s18
    %p20 = scmp.eq.s32.totalorder %s19, 0
    %s22 = sadd.s32 %s21, 1
    %s23 = scalar_select %p20, %s21, %s22
    %p26 = pneg %p20
    %p27 = scmp.eq.s32.totalorder %s11, 1
    %p28 = por %p26, %p27
    %p29 = scmp.ne.s32.totalorder %s21, %s24
    %p30 = scmp.eq.s32.totalorder %s11, 0
    %p31 = por %p29, %p30
    %p32 = scmp.ne.s32.totalorder %s21, %s24
    %p33 = scmp.eq.s32.totalorder %s16, 1
    %p34 = por %p32, %p33
    %p35 = scmp.ne.s32.totalorder %s24, %s25
    %p36 = scmp.eq.s32.totalorder %s16, 0
    %p37 = por %p35, %p36
    %p38 = scmp.ne.s32.totalorder %s24, %s25
    %p39 = scmp.eq.s32.totalorder %s17, 1
    %p40 = por %p38, %p39
    %p42 = scmp.ne.s32.totalorder %s25, %s41
    %p43 = scmp.eq.s32.totalorder %s17, 0
    %p44 = por %p42, %p43
    %s46 = sadd.s32 %s45, 1
    %p49 = scmp.eq.s32.totalorder %s11, 1
    %p50 = scmp.ne.s32.totalorder %s45, %s47
    %p51 = scmp.eq.s32.totalorder %s11, 0
    %p52 = por %p50, %p51
    %p53 = scmp.ne.s32.totalorder %s45, %s47
    %p54 = scmp.eq.s32.totalorder %s16, 1
    %p55 = por %p53, %p54
    %p56 = scmp.ne.s32.totalorder %s47, %s48
    %p57 = scmp.eq.s32.totalorder %s16, 0
    %p58 = por %p56, %p57
    %p59 = scmp.ne.s32.totalorder %s47, %s48
    %p60 = scmp.eq.s32.totalorder %s17, 1
    %p61 = por %p59, %p60
    %p63 = scmp.ne.s32.totalorder %s48, %s62
    %p64 = scmp.eq.s32.totalorder %s17, 0
    %p65 = por %p63, %p64
    %s67 = sadd.s32 %s66, 1
    %p70 = scmp.eq.s32.totalorder %s11, 1
    %p71 = scmp.ne.s32.totalorder %s66, %s68
    %p72 = scmp.eq.s32.totalorder %s11, 0
    %p73 = por %p71, %p72
    %p74 = scmp.ne.s32.totalorder %s66, %s68
    %p75 = scmp.eq.s32.totalorder %s16, 1
    %p76 = por %p74, %p75
    %p77 = scmp.ne.s32.totalorder %s68, %s69
    %p78 = scmp.eq.s32.totalorder %s16, 0
    %p79 = por %p77, %p78
    %p80 = scmp.ne.s32.totalorder %s68, %s69
    %p81 = scmp.eq.s32.totalorder %s17, 1
    %p82 = por %p80, %p81
    %p84 = scmp.ne.s32.totalorder %s69, %s83
    %p85 = scmp.eq.s32.totalorder %s17, 0
    %p86 = por %p84, %p85
    %s88 = sadd.s32 %s87, 1
    %p91 = scmp.eq.s32.totalorder %s11, 1
    %p92 = scmp.ne.s32.totalorder %s87, %s89
    %p93 = scmp.eq.s32.totalorder %s11, 0
    %p94 = por %p92, %p93
    %p95 = scmp.ne.s32.totalorder %s87, %s89
    %p96 = scmp.eq.s32.totalorder %s16, 1
    %p97 = por %p95, %p96
    %p98 = scmp.ne.s32.totalorder %s89, %s90
    %p99 = scmp.eq.s32.totalorder %s16, 0
    %p100 = por %p98, %p99
    %p101 = scmp.ne.s32.totalorder %s89, %s90
    %p102 = scmp.eq.s32.totalorder %s17, 1
    %p103 = por %p101, %p102
    %p105 = scmp.ne.s32.totalorder %s90, %s104
    %p106 = scmp.eq.s32.totalorder %s17, 0
    %p107 = por %p105, %p106
    %s109 = sadd.s32 %s108, 1
    %p112 = scmp.eq.s32.totalorder %s11, 1
    %p113 = scmp.ne.s32.totalorder %s108, %s110
    %p114 = scmp.eq.s32.totalorder %s11, 0
    %p115 = por %p113, %p114
    %p116 = scmp.ne.s32.totalorder %s108, %s110
    %p117 = scmp.eq.s32.totalorder %s16, 1
    %p118 = por %p116, %p117
    %p119 = scmp.ne.s32.totalorder %s110, %s111
    %p120 = scmp.eq.s32.totalorder %s16, 0
    %p121 = por %p119, %p120
    %p122 = scmp.ne.s32.totalorder %s110, %s111
    %p123 = scmp.eq.s32.totalorder %s17, 1
    %p124 = por %p122, %p123
    %p126 = scmp.ne.s32.totalorder %s111, %s125
    %p127 = scmp.eq.s32.totalorder %s17, 0
    %p128 = por %p126, %p127
    %s129 = ssub.s32 %s11, %s18
    %p130 = scmp.eq.s32.totalorder %s129, 0
    %s132 = sadd.s32 %s131, 1
    %s133 = scalar_select %p130, %s131, %s132
    %p136 = pneg %p130
    %p137 = scmp.eq.s32.totalorder %s11, 1
    %p138 = por %p136, %p137
    %p139 = scmp.ne.s32.totalorder %s131, %s134
    %p140 = scmp.eq.s32.totalorder %s11, 0
    %p141 = por %p139, %p140
    %p142 = scmp.ne.s32.totalorder %s131, %s134
    %p143 = scmp.eq.s32.totalorder %s16, 1
    %p144 = por %p142, %p143
    %p145 = scmp.ne.s32.totalorder %s134, %s135
    %p146 = scmp.eq.s32.totalorder %s16, 0
    %p147 = por %p145, %p146
    %p148 = scmp.ne.s32.totalorder %s134, %s135
    %p149 = scmp.eq.s32.totalorder %s17, 1
    %p150 = por %p148, %p149
    %p152 = scmp.ne.s32.totalorder %s135, %s151
    %p153 = scmp.eq.s32.totalorder %s17, 0
    %p154 = por %p152, %p153
    %p155 = scmp.le.s32.totalorder 1, %s11
    %p156 = scmp.lt.s32.totalorder %s11, 3
    %p157 = pnand %p155, %p156
    %p158 = pneg %p157
    // Predicated region
    $region9: #{cam_forward.1} parent=5 // pred_check
      _
    $region10: #{cam_forward.1} parent=5 // pred_check_branch
      %160 = sbr.rel (%p157) target = $region12
    $region11: #{cam_forward.1} parent=5 // pred_region
      %s161 = ssub.s32 %s11, 1
      // Predicated region
      $region13: #{cam_forward.1} parent=11 // pred_check
        %p162 = pneg %p58
      $region14: #{cam_forward.1} parent=11 // pred_check_branch
        %164 = sbr.rel (%p162) target = $region16
      $region15: #{cam_forward.1} parent=11 // pred_region
        _
      $region16: #{cam_forward.1} parent=11 // pred_fallthru
        _
      // Predicated region
      $region17: #{cam_forward.1} parent=11 // pred_check
        %p165 = pneg %p79
      $region18: #{cam_forward.1} parent=11 // pred_check_branch
        %167 = sbr.rel (%p165) target = $region20
      $region19: #{cam_forward.1} parent=11 // pred_region
        _
      $region20: #{cam_forward.1} parent=11 // pred_fallthru
        _
      // Predicated region
      $region21: #{cam_forward.1} parent=11 // pred_check
        %p168 = pneg %p100
      $region22: #{cam_forward.1} parent=11 // pred_check_branch
        %170 = sbr.rel (%p168) target = $region24
      $region23: #{cam_forward.1} parent=11 // pred_region
        _
      $region24: #{cam_forward.1} parent=11 // pred_fallthru
        _
      // Predicated region
      $region25: #{cam_forward.1} parent=11 // pred_check
        %p171 = pneg %p121
      $region26: #{cam_forward.1} parent=11 // pred_check_branch
        %173 = sbr.rel (%p171) target = $region28
      $region27: #{cam_forward.1} parent=11 // pred_region
        _
      $region28: #{cam_forward.1} parent=11 // pred_fallthru
        _
    $region12: #{cam_forward.1} parent=5 // pred_fallthru
      _
    %p174 = scmp.lt.s32.totalorder %s11, 2
    // Predicated region
    $region29: #{cam_forward.1} parent=5 // pred_check
      %p175 = pneg %p174
    $region30: #{cam_forward.1} parent=5 // pred_check_branch
      %177 = sbr.rel (%p175) target = $region32
    $region31: #{cam_forward.1} parent=5 // pred_region
      // Predicated region
      $region33: #{cam_forward.1} parent=31 // pred_check
        %p178 = pneg %p31
      $region34: #{cam_forward.1} parent=31 // pred_check_branch
        %180 = sbr.rel (%p178) target = $region36
      $region35: #{cam_forward.1} parent=31 // pred_region
        %p181 = scmp.lt.s32.totalorder %s11, 1
        %s182 = scalar_select %p181, %s11, 1
        %s183 = smul.addr %s182, 2
        %s184 = smul.addr %s183, 8
        %s185 = scalar_lea.vmem %s0, %s184
      $region36: #{cam_forward.1} parent=31 // pred_fallthru
        _
    $region32: #{cam_forward.1} parent=5 // pred_fallthru
      _
    %p186 = scmp.le.s32.totalorder 1, %s11
    %p187 = scmp.lt.s32.totalorder %s11, 3
    %p188 = pnand %p186, %p187
    %p189 = pneg %p188
    // Predicated region
    $region37: #{cam_forward.1} parent=5 // pred_check
      _
    $region38: #{cam_forward.1} parent=5 // pred_check_branch
      %191 = sbr.rel (%p188) target = $region40
    $region39: #{cam_forward.1} parent=5 // pred_region
      %s192 = ssub.s32 %s11, 1
      %p193 = scmp.lt.s32.totalorder %s16, 1
      %s194 = scalar_select %p193, %s16, 1
      %s195 = smul.addr %s194, 2
      %s196 = smul.addr %s195, 8
      %s197 = scalar_lea.vmem %s0, %s196
      %p198 = pneg %p37
      %p199 = pneg %p34
      %p200 = pneg %p58
      %p201 = pneg %p55
      %p202 = pneg %p79
      %p203 = pneg %p76
      %p204 = pneg %p100
      %p205 = pneg %p97
      %p206 = pneg %p121
      %p207 = pneg %p118
      %p208 = pneg %p147
      %p209 = pneg %p144
      %p210 = scmp.lt.s32.totalorder %s16, 1
      %s211 = scalar_select %p210, %s16, 1
      %s212 = smul.addr %s211, 2
      %s213 = smul.addr %s212, 8
      %s214 = scalar_lea.vmem %s5, %s213
      %p215 = scmp.lt.s32.totalorder %s16, 1
      %s216 = scalar_select %p215, %s16, 1
      %s217 = smul.addr %s216, 2
      %s218 = smul.addr %s217, 8
      %s219 = scalar_lea.vmem %s0, %s218
      %p220 = scmp.lt.s32.totalorder %s16, 1
      %s221 = scalar_select %p220, %s16, 1
      %s222 = smul.addr %s221, 2
      %s223 = smul.addr %s222, 8
      %s224 = scalar_lea.vmem %s5, %s223
      %v225 = vld [vmem:[%s219] sm:$0xff]
      %v226 = vld [vmem:[%s219 + $0x8] sm:$0xff]
      %v227 = vmax.f32 %v225, %v226
      %228 = vmax.xlane.f32.xlu0 %v227
      %v229 = vpop.xlane.xlu0 %228
      %v230 = vadd.f32 %v225, %v226
      %231 = vadd.xlane.f32.xlu0 %v230
      %v232 = vpop.xlane.xlu0 %231
      %v233 = vmul.f32 %v232, 0.00390625
      %vm234 = vcmask 7168
      %v235 = vsel %vm234, %v229, %v233
      %v236 = vld [vmem:[%s1] sm:$0xf]
      %v237 = vld [vmem:[%s2] sm:$0xf]
      %v238 = vld [vmem:[%s3] sm:$0xff]
      %v239 = vld [vmem:[%s4] sm:$0xff]
      %241 = vset.pattern.permute.xlu0 0
      %242 = vperm.xlu0 %241, %v237
      %v243 = vpop.permute.xlu0 %242
      %vm245 = vcmask 64512
      %v247 = vsel %vm245, %v236, 0
      %249 = vmatprep.subr.mxu0 0.0
      %250 = vmatpush1.msra.mxu0 0.0
      %251 = vmatprep.subr.mxu0 0.0
      %252 = vmatpush1.msra.mxu0 0.0
      %253 = vmatprep.subr.mxu0 0.0
      %254 = vmatpush1.msra.mxu0 0.0
      %255 = vmatprep.subr.mxu0 0.0
      %256 = vmatpush1.msra.mxu0 0.0
      %257 = vmatprep.subr.mxu0 0.0
      %258 = vmatpush1.msra.mxu0 0.0
      %259 = vmatprep.subr.mxu0 0.0
      %260 = vmatpush1.msra.mxu0 0.0
      %261 = vmatprep.subr.mxu0 0.0
      %262 = vmatpush1.msra.mxu0 0.0
      %263 = vmatprep.subr.mxu0 0.0
      %264 = vmatpush1.msra.mxu0 0.0
      %265 = vmatprep.subr.mxu0 0.0
      %266 = vmatpush1.msra.mxu0 0.0
      %267 = vmatprep.subr.mxu0 0.0
      %268 = vmatpush1.msra.mxu0 0.0
      %269 = vmatprep.subr.mxu0 0.0
      %270 = vmatpush1.msra.mxu0 0.0
      %271 = vmatprep.subr.mxu0 0.0
      %272 = vmatpush1.msra.mxu0 0.0
      %273 = vmatprep.subr.mxu0 0.0
      %274 = vmatpush1.msra.mxu0 0.0
      %275 = vmatprep.subr.mxu0 0.0
      %276 = vmatpush1.msra.mxu0 0.0
      %277 = vmatprep.subr.mxu0 0.0
      %278 = vmatpush1.msra.mxu0 0.0
      %279 = vmatprep.subr.mxu0 0.0
      %280 = vmatpush1.msra.mxu0 %v235
      %281 = vmatprep.subr.mxu0 0.0
      %282 = vmatpush2.msra.mxu0 0.0
      %283 = vmatprep.subr.mxu0 0.0
      %284 = vmatpush2.msra.mxu0 0.0
      %285 = vmatprep.subr.mxu0 0.0
      %286 = vmatpush2.msra.mxu0 0.0
      %287 = vmatprep.subr.mxu0 0.0
      %288 = vmatpush2.msra.mxu0 0.0
      %289 = vmatprep.subr.mxu0 0.0
      %290 = vmatpush2.msra.mxu0 0.0
      %291 = vmatprep.subr.mxu0 0.0
      %292 = vmatpush2.msra.mxu0 0.0
      %293 = vmatprep.subr.mxu0 0.0
      %294 = vmatpush2.msra.mxu0 0.0
      %295 = vmatprep.subr.mxu0 0.0
      %296 = vmatpush2.msra.mxu0 0.0
      %297 = vmatprep.subr.mxu0 0.0
      %298 = vmatpush2.msra.mxu0 0.0
      %299 = vmatprep.subr.mxu0 0.0
      %300 = vmatpush2.msra.mxu0 0.0
      %301 = vmatprep.subr.mxu0 0.0
      %302 = vmatpush2.msra.mxu0 0.0
      %303 = vmatprep.subr.mxu0 0.0
      %304 = vmatpush2.msra.mxu0 0.0
      %305 = vmatprep.subr.mxu0 0.0
      %306 = vmatpush2.msra.mxu0 0.0
      %307 = vmatprep.subr.mxu0 0.0
      %308 = vmatpush2.msra.mxu0 0.0
      %309 = vmatprep.subr.mxu0 0.0
      %310 = vmatpush2.msra.mxu0 0.0
      %311 = vmatprep.subr.mxu0 0.0
      %312 = vmatpush2.msra.mxu0 0.0
      %313 = vmatprep.mubr.f32.mxu0 0.0
      %314 = vmatmul.mubr.f32.gmra.mxu0 %v247
      %v315 = vpop.f32.mrf.mxu0
      %v316 = vadd.f32 %v243, %v315
      %v317 = vpop.f32.mrf.mxu0
      %318 = vdwg.mxu0
      %v319 = vmax.f32 %v316, 0.0
      %321 = vset.pattern.permute.xlu0 0
      %322 = vperm.xlu0 %321, %v239
      %v323 = vpop.permute.xlu0 %322
      %vm325 = vcmask 31744
      %v327 = vsel %vm325, %v238, 0
      %vm329 = vcmask 1043456
      %v331 = vsel %vm329, %v319, 0
      %333 = vmatprep.subr.mxu0 0.0
      %334 = vmatpush1.msra.mxu0 0.0
      %335 = vmatprep.subr.mxu0 0.0
      %336 = vmatpush1.msra.mxu0 0.0
      %337 = vmatprep.subr.mxu0 0.0
      %338 = vmatpush1.msra.mxu0 0.0
      %339 = vmatprep.subr.mxu0 0.0
      %340 = vmatpush1.msra.mxu0 0.0
      %341 = vmatprep.subr.mxu0 0.0
      %342 = vmatpush1.msra.mxu0 0.0
      %343 = vmatprep.subr.mxu0 0.0
      %344 = vmatpush1.msra.mxu0 0.0
      %345 = vmatprep.subr.mxu0 0.0
      %346 = vmatpush1.msra.mxu0 0.0
      %347 = vmatprep.subr.mxu0 0.0
      %348 = vmatpush1.msra.mxu0 0.0
      %349 = vmatprep.subr.mxu0 0.0
      %350 = vmatpush1.msra.mxu0 0.0
      %351 = vmatprep.subr.mxu0 0.0
      %352 = vmatpush1.msra.mxu0 0.0
      %353 = vmatprep.subr.mxu0 0.0
      %354 = vmatpush1.msra.mxu0 0.0
      %355 = vmatprep.subr.mxu0 0.0
      %356 = vmatpush1.msra.mxu0 0.0
      %357 = vmatprep.subr.mxu0 0.0
      %358 = vmatpush1.msra.mxu0 0.0
      %359 = vmatprep.subr.mxu0 0.0
      %360 = vmatpush1.msra.mxu0 0.0
      %361 = vmatprep.subr.mxu0 0.0
      %362 = vmatpush1.msra.mxu0 0.0
      %363 = vmatprep.subr.mxu0 0.0
      %364 = vmatpush1.msra.mxu0 %v331
      %365 = vmatprep.subr.mxu0 0.0
      %366 = vmatpush2.msra.mxu0 0.0
      %367 = vmatprep.subr.mxu0 0.0
      %368 = vmatpush2.msra.mxu0 0.0
      %369 = vmatprep.subr.mxu0 0.0
      %370 = vmatpush2.msra.mxu0 0.0
      %371 = vmatprep.subr.mxu0 0.0
      %372 = vmatpush2.msra.mxu0 0.0
      %373 = vmatprep.subr.mxu0 0.0
      %374 = vmatpush2.msra.mxu0 0.0
      %375 = vmatprep.subr.mxu0 0.0
      %376 = vmatpush2.msra.mxu0 0.0
      %377 = vmatprep.subr.mxu0 0.0
      %378 = vmatpush2.msra.mxu0 0.0
      %379 = vmatprep.subr.mxu0 0.0
      %380 = vmatpush2.msra.mxu0 0.0
      %381 = vmatprep.subr.mxu0 0.0
      %382 = vmatpush2.msra.mxu0 0.0
      %383 = vmatprep.subr.mxu0 0.0
      %384 = vmatpush2.msra.mxu0 0.0
      %385 = vmatprep.subr.mxu0 0.0
      %386 = vmatpush2.msra.mxu0 0.0
      %387 = vmatprep.subr.mxu0 0.0
      %388 = vmatpush2.msra.mxu0 0.0
      %389 = vmatprep.subr.mxu0 0.0
      %390 = vmatpush2.msra.mxu0 0.0
      %391 = vmatprep.subr.mxu0 0.0
      %392 = vmatpush2.msra.mxu0 0.0
      %393 = vmatprep.subr.mxu0 0.0
      %394 = vmatpush2.msra.mxu0 0.0
      %395 = vmatprep.subr.mxu0 0.0
      %396 = vmatpush2.msra.mxu0 0.0
      %397 = vmatprep.mubr.f32.mxu0 0.0
      %398 = vmatmul.mubr.f32.gmra.mxu0 %v327
      %v399 = vpop.f32.mrf.mxu0
      %v400 = vadd.f32 %v323, %v399
      %v401 = vpop.f32.mrf.mxu0
      %402 = vdwg.mxu0
      %vm403 = vcmask 15360
      %v404 = vsel %vm403, %v400, 0.0
      %405 = vadd.xlane.f32.xlu0 %v404
      %v406 = vpop.xlane.xlu0 %405
      %v407 = vxor.u32 %v406, 2147483648
      %v408 = vmul.f32 %v407, 1.442695
      %v409 = vpow.pop %v408
      %v410 = vadd.f32 %v409, 1.0
      %v411 = vrcp.pop %v410
      %v412 = vmul.f32 1.0, %v411
      %v413 = vmul.f32 %v225, %v412
      %v414 = vmul.f32 %v226, %v412
      %415 = vst [vmem:[%s224] sm:$0xff] %v413
      %416 = vst [vmem:[%s224 + $0x8] sm:$0xff] %v414
      %p417 = scmp.lt.s32.totalorder %s16, 1
      %s418 = scalar_select %p417, %s16, 1
      %s419 = smul.addr %s418, 2
      %s420 = smul.addr %s419, 8
      %s421 = scalar_lea.vmem %s5, %s420
      // Predicated region
      $region41: #{cam_forward.1} parent=39 // pred_check
        %p422 = pneg %p144
      $region42: #{cam_forward.1} parent=39 // pred_check_branch
        %424 = sbr.rel (%p422) target = $region44
      $region43: #{cam_forward.1} parent=39 // pred_region
        _
      $region44: #{cam_forward.1} parent=39 // pred_fallthru
        _
    $region40: #{cam_forward.1} parent=5 // pred_fallthru
      _
    %p425 = scmp.le.s32.totalorder 2, %s11
    // Predicated region
    $region45: #{cam_forward.1} parent=5 // pred_check
      %p426 = pneg %p425
    $region46: #{cam_forward.1} parent=5 // pred_check_branch
      %428 = sbr.rel (%p426) target = $region48
    $region47: #{cam_forward.1} parent=5 // pred_region
      %s429 = ssub.s32 %s11, 2
      // Predicated region
      $region49: #{cam_forward.1} parent=47 // pred_check
        %p430 = pneg %p150
      $region50: #{cam_forward.1} parent=47 // pred_check_branch
        %432 = sbr.rel (%p430) target = $region52
      $region51: #{cam_forward.1} parent=47 // pred_region
        %p433 = scmp.lt.s32.totalorder %s17, 1
        %s434 = scalar_select %p433, %s17, 1
        %s435 = smul.addr %s434, 2
        %s436 = smul.addr %s435, 8
        %s437 = scalar_lea.vmem %s5, %s436
      $region52: #{cam_forward.1} parent=47 // pred_fallthru
        _
    $region48: #{cam_forward.1} parent=5 // pred_fallthru
      _
  $region6: #{cam_forward.1} parent=0 // loop_footer
    %s15 = sadd.s32 1, %s11
  $region7: #{cam_forward.1} parent=0 // loop_footer_branch
    %10 = sbr.rel target = $region3
  $region8: #{cam_forward.1} parent=0 // loop_exit
    _

</llo_original>
